<compile_context>
chip_gen: v5e
topology: v5e:2x2
jax: 0.10.0
libtpu: 0.0.40
codegen_flags: <defaults>
</compile_context>

<pallas_src>
import jax
import jax.numpy as jnp
from jax.experimental import pallas as pl
from jax.experimental.pallas import tpu as pltpu


def _cdiv(a, b):
    return -(-a // b)


def _device_kind() -> str:
    try:
        return jax.devices()[0].device_kind.lower()
    except Exception:
        return ""


def _target_block_bytes(kind: str) -> int:
    # Bigger blocks amortize per-grid-step overhead; sized so 2x double-buffered
    # input + output stays comfortably under the (explicitly raised) VMEM limit.
    if "v7" in kind or "7x" in kind:
        return 8 * 1024 * 1024
    if "v6" in kind:
        return 4 * 1024 * 1024
    return 2 * 1024 * 1024  # v5e and unknown/CPU-interpret: safest default


def _compute_dtype(x_dtype, kind: str):
    # bf16 EUP/VPU exists on v6e/v7x only; keep f32 math elsewhere.
    if x_dtype == jnp.bfloat16 and ("v6" in kind or "v7" in kind or "7x" in kind):
        return jnp.bfloat16
    return jnp.float32


def _make_hloss_kernel(compute_dtype):
    def kernel(x_ref, o_ref):
        # x_ref: (TILE_B, C, TILE_HW) VMEM tile;  o_ref: (TILE_B, TILE_HW)
        x = x_ref[...].astype(compute_dtype)
        b = x * jnp.log(x)                      # VPU mul + EUP log
        # Channel reduction: sublane-axis reduce (VPU adds + XLU), accumulate
        # in f32.  NaNs from padded lane/batch edges stay in masked columns
        # because the reduction never spans the HW or B axes.
        s = jnp.sum(b, axis=1, dtype=jnp.float32)
        o_ref[...] = (-s).astype(o_ref.dtype)
    return kernel


def _choose_tiles(B, C, HW, itemsize, target_bytes):
    """Pick (TILE_B, TILE_HW): lane-dense, ~target_bytes per (padded) input block."""
    sublane = max(1, 32 // itemsize)            # 8 rows f32, 16 rows bf16, ...
    c_pad = _cdiv(C, sublane) * sublane         # sublane-padded channel count
    bytes_per_batch_lane = c_pad * itemsize     # VMEM bytes per batch row per lane col

    if HW <= 128:
        tile_hw = HW                            # equal-to-full lane dim is legal
    else:
        hw_cap = (HW // 128) * 128              # largest 128-multiple <= HW
        tile_hw = (target_bytes // bytes_per_batch_lane) // 128 * 128
        tile_hw = max(128, min(hw_cap, tile_hw))

    # Pack batch rows per step when the per-batch slab is small.
    tile_b = max(1, target_bytes // (bytes_per_batch_lane * tile_hw))
    tile_b = min(B, tile_b)
    if tile_b < B and tile_b >= 8:
        tile_b = (tile_b // 8) * 8              # unmasked output sublane stores

    # Guarantee >= 2 grid steps (v7x megacore sharding + DMA/compute overlap)
    # by splitting along the lane axis when possible.
    while _cdiv(B, tile_b) * _cdiv(HW, tile_hw) < 2 and tile_hw > 128:
        tile_hw = max(128, ((tile_hw // 2) // 128) * 128)

    return tile_b, tile_hw


def hloss(x: jax.Array) -> jax.Array:
    """Pallas HLoss.forward for NCHW input: returns -sum_c x*log(x), shape (B, H, W)."""
    B, C, H, W = x.shape
    HW = H * W
    x_flat = x.reshape(B, C, HW)
    itemsize = jnp.dtype(x.dtype).itemsize

    kind = _device_kind()
    tile_b, tile_hw = _choose_tiles(B, C, HW, itemsize, _target_block_bytes(kind))
    grid = (pl.cdiv(B, tile_b), pl.cdiv(HW, tile_hw))

    cost = pl.CostEstimate(
        flops=3 * B * C * HW,                   # mul + add-reduce + negate
        transcendentals=B * C * HW,             # one log per element
        bytes_accessed=itemsize * B * HW * (C + 1),
    )

    kernel = _make_hloss_kernel(_compute_dtype(x.dtype, kind))

    out = pl.pallas_call(
        kernel,
        out_shape=jax.ShapeDtypeStruct((B, HW), x.dtype),
        grid_spec=pltpu.PrefetchScalarGridSpec(
            num_scalar_prefetch=0,
            grid=grid,
            in_specs=[
                pl.BlockSpec((tile_b, C, tile_hw), lambda i, j: (i, 0, j)),
            ],
            out_specs=pl.BlockSpec((tile_b, tile_hw), lambda i, j: (i, j)),
        ),
        compiler_params=pltpu.CompilerParams(
            dimension_semantics=("parallel", "parallel"),
            vmem_limit_bytes=32 * 1024 * 1024,
        ),
        cost_estimate=cost,
    )(x_flat)

    return out.reshape(B, H, W)


if __name__ == "__main__":
    key = jax.random.PRNGKey(0)
    B, C, H, W = 2, 4, 16, 16
    # Strictly positive inputs (log is applied directly), like probabilities.
    x = jax.random.uniform(key, (B, C, H, W), dtype=jnp.float32,
                           minval=0.05, maxval=1.0)

    out = hloss(x)
    jax.block_until_ready(out)

    # Pure-JAX reference.
    ref = -jnp.sum(x * jnp.log(x), axis=1)
    assert out.shape == (B, H, W)
    assert jnp.allclose(out, ref, atol=1e-5, rtol=1e-5)

    print("KERNEL_OK")
</pallas_src>

<mosaic_0001>
module attributes {stable_mosaic.version = 11 : i64} {
  func.func @kernel(%arg0: i32, %arg1: i32, %arg2: memref<2x4x128xf32, #tpu.memory_space<vmem>>, %arg3: memref<2x128xf32, #tpu.memory_space<vmem>>) attributes {dimension_semantics = [#tpu.dimension_semantics<parallel>, #tpu.dimension_semantics<parallel>], iteration_bounds = array<i64: 1, 2>, scalar_prefetch = 0 : i64, scratch_operands = 0 : i64, tpu.core_type = #tpu.core_type<tc>, window_params = [{transform_indices = @transform_0, window_bounds = array<i64: 2, 4, 128>}, {transform_indices = @transform_1, window_bounds = array<i64: 2, 128>}]} {
    %c0 = arith.constant 0 : index
    %c0_0 = arith.constant 0 : index
    %c0_1 = arith.constant 0 : index
    %0 = vector.load %arg2[%c0, %c0_0, %c0_1] : memref<2x4x128xf32, #tpu.memory_space<vmem>>, vector<2x4x128xf32>
    %1 = math.log %0 : vector<2x4x128xf32>
    %2 = arith.mulf %0, %1 : vector<2x4x128xf32>
    %cst = arith.constant dense<0.000000e+00> : vector<2x128xf32>
    %3 = vector.multi_reduction <add>, %2, %cst [1] : vector<2x4x128xf32> to vector<2x128xf32>
    %cst_2 = arith.constant 0.000000e+00 : f32
    %4 = vector.broadcast %cst_2 : f32 to vector<2x128xf32>
    %5 = arith.subf %4, %3 : vector<2x128xf32>
    %c0_3 = arith.constant 0 : index
    %c0_4 = arith.constant 0 : index
    %6 = vector.load %arg3[%c0_3, %c0_4] : memref<2x128xf32, #tpu.memory_space<vmem>>, vector<2x128xf32>
    tpu.vector_store %arg3[%c0_3, %c0_4], %5 {strides = array<i32>} : memref<2x128xf32, #tpu.memory_space<vmem>>, vector<2x128xf32>,
    return
  }
  func.func @transform_0(%arg0: i32, %arg1: i32) -> (i32, i32, i32) {
    %c0_i32 = arith.constant 0 : i32
    %c0_i32_0 = arith.constant 0 : i32
    return %arg0, %c0_i32, %arg1 : i32, i32, i32
  }
  func.func @transform_1(%arg0: i32, %arg1: i32) -> (i32, i32) {
    %c0_i32 = arith.constant 0 : i32
    return %arg0, %arg1 : i32, i32
  }
}

</mosaic_0001>

<llo_original>
// kernel: tpu_custom_call.1
$region0: #{tpu_custom_call.1}
  #allocation0 [shape = 'u32[]', space=smem, size = 0x4, offset = 0x4, fixed_abs, tag = 'smem constant byte address 0x4 - core index']
  #allocation1 [shape = 'u32[72,128]{1,0:T(1,128)}', space=vmem, size = 0x9000, scoped, tag = 'internal scratch']
  %s0 = inlined_call_operand.hbm [shape: f32[2,4,256], index: 0, kind: input, shape index: {}]
  %s1 = inlined_call_operand.hbm [shape: f32[2,256], index: 1, kind: output, shape index: {}]
  %s2 = sld [smem:[#allocation0]]
  $region41: #{tpu_custom_call.1} parent=0
    _
  %s4 = ssub.s32 1, %s2
  %s5 = scalar_select 0, %s4, %s2
  $region1: #{tpu_custom_call.1} parent=0
    #allocation2 [shape = 'u8[8192]{0}', space=vmem, size = 0x2000, scoped, tag = 'input window, operand 0']
    #allocation3 [shape = 's32[2]{0}', space=sflag, size = 0x8, scoped, tag = 'scoped memory for tpu_custom_call.1']
    #allocation4 [shape = 's32[2]{0}', space=sflag, size = 0x8, scoped, tag = 'scoped memory for tpu_custom_call.1']
    #allocation5 [shape = 'u8[2048]{0}', space=vmem, size = 0x800, scoped, tag = 'output window, operand 0']
    %6 = vsyncpa [#allocation3], 0
    %s7 = scalar_lea.sflag [#allocation3], 1
    %8 = vsyncpa %s7, 0
    %9 = vsyncpa [#allocation4], 0
    %s10 = scalar_lea.sflag [#allocation4], 1
    %11 = vsyncpa %s10, 0
    loop: start=0, step=1, limit=4
    $region2: #{tpu_custom_call.1} parent=1 // loop_pre_header
      _
    $region3: #{tpu_custom_call.1} parent=1 // loop_header
      %s13 = sphi 0, %s17
      %p14 = scmp.ge.s32.totalorder %s13, 4
      %s20 = sphi 0, %s32
      %s21 = sphi 0, %s28
      %s22 = sphi 0, %s20
      %s23 = sphi 0, %s21
      %s24 = sphi 0, %s22
      %s25 = sphi 0, %s23
      %s37 = sphi 0, %s39
      %s40 = sphi 0, %s37
      %s41 = sphi 0, %s40
      %s57 = sphi 0, %s41
      %s65 = sphi 0, %s67
      %s68 = sphi 0, %s65
      %s69 = sphi 0, %s68
      %s85 = sphi 0, %s69
    $region4: #{tpu_custom_call.1} parent=1 // loop_header_branch
      %16 = sbr.rel (%p14) target = $region8
    $region5: #{tpu_custom_call.1} parent=1 // loop_body
      %s18 = ssub.s32 %s13, 1
      %s19 = ssub.s32 %s13, 2
      %s26 = sadd.s32 1, %s21
      %p27 = scmp.ge.s32.totalorder %s26, 2
      %s28 = scalar_select %p27, 0, %s26
      %s29 = sadd.s32 1, %s20
      %s30 = scalar_select %p27, %s29, %s20
      %p31 = scmp.ge.s32.totalorder %s30, 1
      %s32 = scalar_select %p31, 0, %s30
      %s33 = ssub.s32 %s20, %s32
      %s34 = ssub.s32 %s21, %s28
      %s35 = sor.u32 %s33, %s34
      %p36 = scmp.eq.s32.totalorder %s35, 0
      %s38 = sadd.s32 %s37, 1
      %s39 = scalar_select %p36, %s37, %s38
      %p42 = pneg %p36
      %p43 = scmp.eq.s32.totalorder %s13, 1
      %p44 = por %p42, %p43
      %p45 = scmp.ne.s32.totalorder %s37, %s40
      %p46 = scmp.eq.s32.totalorder %s13, 0
      %p47 = por %p45, %p46
      %p48 = scmp.ne.s32.totalorder %s37, %s40
      %p49 = scmp.eq.s32.totalorder %s18, 1
      %p50 = por %p48, %p49
      %p51 = scmp.ne.s32.totalorder %s40, %s41
      %p52 = scmp.eq.s32.totalorder %s18, 0
      %p53 = por %p51, %p52
      %p54 = scmp.ne.s32.totalorder %s40, %s41
      %p55 = scmp.eq.s32.totalorder %s19, 1
      %p56 = por %p54, %p55
      %p58 = scmp.ne.s32.totalorder %s41, %s57
      %p59 = scmp.eq.s32.totalorder %s19, 0
      %p60 = por %p58, %p59
      %s61 = ssub.s32 %s20, %s32
      %s62 = ssub.s32 %s21, %s28
      %s63 = sor.u32 %s61, %s62
      %p64 = scmp.eq.s32.totalorder %s63, 0
      %s66 = sadd.s32 %s65, 1
      %s67 = scalar_select %p64, %s65, %s66
      %p70 = pneg %p64
      %p71 = scmp.eq.s32.totalorder %s13, 1
      %p72 = por %p70, %p71
      %p73 = scmp.ne.s32.totalorder %s65, %s68
      %p74 = scmp.eq.s32.totalorder %s13, 0
      %p75 = por %p73, %p74
      %p76 = scmp.ne.s32.totalorder %s65, %s68
      %p77 = scmp.eq.s32.totalorder %s18, 1
      %p78 = por %p76, %p77
      %p79 = scmp.ne.s32.totalorder %s68, %s69
      %p80 = scmp.eq.s32.totalorder %s18, 0
      %p81 = por %p79, %p80
      %p82 = scmp.ne.s32.totalorder %s68, %s69
      %p83 = scmp.eq.s32.totalorder %s19, 1
      %p84 = por %p82, %p83
      %p86 = scmp.ne.s32.totalorder %s69, %s85
      %p87 = scmp.eq.s32.totalorder %s19, 0
      %p88 = por %p86, %p87
      %p89 = scmp.le.s32.totalorder 1, %s13
      %p90 = scmp.lt.s32.totalorder %s13, 3
      %p91 = pnand %p89, %p90
      %p92 = pneg %p91
      // Predicated region
      $region9: #{tpu_custom_call.1} parent=5 // pred_check
        _
      $region10: #{tpu_custom_call.1} parent=5 // pred_check_branch
        %94 = sbr.rel (%p91) target = $region12
      $region11: #{tpu_custom_call.1} parent=5 // pred_region
        %s95 = ssub.s32 %s13, 1
      $region12: #{tpu_custom_call.1} parent=5 // pred_fallthru
        _
      %p96 = scmp.lt.s32.totalorder %s13, 2
      // Predicated region
      $region13: #{tpu_custom_call.1} parent=5 // pred_check
        %p97 = pneg %p96
      $region14: #{tpu_custom_call.1} parent=5 // pred_check_branch
        %99 = sbr.rel (%p97) target = $region16
      $region15: #{tpu_custom_call.1} parent=5 // pred_region
        // Predicated region
        $region17: #{tpu_custom_call.1} parent=15 // pred_check
          %p100 = pneg %p47
        $region18: #{tpu_custom_call.1} parent=15 // pred_check_branch
          %102 = sbr.rel (%p100) target = $region20
        $region19: #{tpu_custom_call.1} parent=15 // pred_region
          %s103 = sand.u32 %s37, 1
          %s104 = scalar_lea.sflag [#allocation3], %s103
          %s105 = sand.u32 %s37, 1
          %s106 = smul.addr %s105, 8
          %s107 = scalar_lea.vmem [#allocation2], %s106
          %s108 = smul.u32 2, %s20
          %110 = vsyncadd %s104, 0
          %s111 = smul.addr %s108, 2
          %s112 = sadd.s32 %s21, %s111
          %s113 = smul.addr %s112, 4
          %s114 = scalar_lea.hbm %s0, %s113
          %s115 = sshll.u32 %s114, 4
          %s116 = int_to_ptr.hbm [resolvable:$true] %s115
          %s117 = sshll.u32 %s107, 4
          %s118 = int_to_ptr.vmem [resolvable:$true] %s117
          %123 = dma.hbm_to_vmem [thread:$0]  %s116, 128, %s118, %s104, 128, 64, 4
        $region20: #{tpu_custom_call.1} parent=15 // pred_fallthru
          _
      $region16: #{tpu_custom_call.1} parent=5 // pred_fallthru
        _
      %p124 = scmp.le.s32.totalorder 1, %s13
      %p125 = scmp.lt.s32.totalorder %s13, 3
      %p126 = pnand %p124, %p125
      %p127 = pneg %p126
      // Predicated region
      $region21: #{tpu_custom_call.1} parent=5 // pred_check
        _
      $region22: #{tpu_custom_call.1} parent=5 // pred_check_branch
        %129 = sbr.rel (%p126) target = $region24
      $region23: #{tpu_custom_call.1} parent=5 // pred_region
        %s130 = ssub.s32 %s13, 1
        %s131 = sand.u32 %s40, 1
        %s132 = scalar_lea.sflag [#allocation3], %s131
        %s133 = sand.u32 %s40, 1
        %s134 = smul.addr %s133, 8
        %s135 = scalar_lea.vmem [#allocation2], %s134
        // Predicated region
        $region25: #{tpu_custom_call.1} parent=23 // pred_check
          %p136 = pneg %p53
        $region26: #{tpu_custom_call.1} parent=23 // pred_check_branch
          %138 = sbr.rel (%p136) target = $region28
        $region27: #{tpu_custom_call.1} parent=23 // pred_region
          %140 = dma.done %s132, 128
        $region28: #{tpu_custom_call.1} parent=23 // pred_fallthru
          _
        %s141 = sand.u32 %s40, 1
        %s142 = scalar_lea.sflag [#allocation3], %s141
        %s143 = sand.u32 %s40, 1
        %s144 = smul.addr %s143, 8
        %s145 = scalar_lea.vmem [#allocation2], %s144
        %p146 = pneg %p53
        %p147 = pneg %p50
        %p148 = pneg %p81
        %p149 = pneg %p78
        %s150 = sand.u32 %s68, 1
        %s151 = scalar_lea.sflag [#allocation4], %s150
        %s152 = sand.u32 %s68, 1
        %s153 = smul.addr %s152, 2
        %s154 = scalar_lea.vmem [#allocation5], %s153
        %s155 = smul.u32 2, %s22
        %v156 = vld [vmem:[%s135] sm:$0xf]
        %v157 = vld [vmem:[%s135 + $0x4] sm:$0xf]
        %v158 = vlog2.pop %v156
        %v159 = vmul.f32 %v158, 0.6931472
        %v160 = vlog2.pop %v157
        %v161 = vmul.f32 %v160, 0.6931472
        %v162 = vmul.f32 %v156, %v159
        %v163 = vmul.f32 %v157, %v161
        %vm164 = vcmask 1043456
        %v165 = vsel %vm164, %v162, 0.0
        %v166 = vrot.slane %v165, 4
        %v167 = vadd.f32 %v165, %v166
        %v168 = vrot.slane %v167, 2
        %v169 = vadd.f32 %v167, %v168
        %v170 = vrot.slane %v169, 1
        %v171 = vadd.f32 %v169, %v170
        %v172 = vsel %vm164, %v163, 0.0
        %v173 = vrot.slane %v172, 4
        %v174 = vadd.f32 %v172, %v173
        %v175 = vrot.slane %v174, 2
        %v176 = vadd.f32 %v174, %v175
        %v177 = vrot.slane %v176, 1
        %v178 = vadd.f32 %v176, %v177
        %v179 = vsub.f32 0.0, %v171
        %v180 = vsub.f32 0.0, %v178
        %vm183 = vcmask 1041409
        %v184 = vsel %vm183, %v180, %v179
        %186 = vst [vmem:[%s154] sm:$0x3] %v184
        %s187 = sand.u32 %s68, 1
        %s188 = scalar_lea.sflag [#allocation4], %s187
        %s189 = sand.u32 %s68, 1
        %s190 = smul.addr %s189, 2
        %s191 = scalar_lea.vmem [#allocation5], %s190
        // Predicated region
        $region29: #{tpu_custom_call.1} parent=23 // pred_check
          %p192 = pneg %p78
        $region30: #{tpu_custom_call.1} parent=23 // pred_check_branch
          %194 = sbr.rel (%p192) target = $region32
        $region31: #{tpu_custom_call.1} parent=23 // pred_region
          %196 = vsyncadd %s188, 0
          %s197 = smul.addr %s22, 2
          %s198 = sadd.s32 %s23, %s197
          %s199 = smul.addr %s198, 2
          %s200 = scalar_lea.hbm %s1, %s199
          %s202 = sshll.u32 %s191, 4
          %s203 = int_to_ptr.vmem [resolvable:$true] %s202
          %s204 = sshll.u32 %s200, 4
          %s205 = int_to_ptr.hbm [resolvable:$true] %s204
          %207 = dma.vmem_to_hbm [thread:$0]  %s203, 32, %s205, %s188
        $region32: #{tpu_custom_call.1} parent=23 // pred_fallthru
          _
      $region24: #{tpu_custom_call.1} parent=5 // pred_fallthru
        _
      %p208 = scmp.le.s32.totalorder 2, %s13
      // Predicated region
      $region33: #{tpu_custom_call.1} parent=5 // pred_check
        %p209 = pneg %p208
      $region34: #{tpu_custom_call.1} parent=5 // pred_check_branch
        %211 = sbr.rel (%p209) target = $region36
      $region35: #{tpu_custom_call.1} parent=5 // pred_region
        %s212 = ssub.s32 %s13, 2
        // Predicated region
        $region37: #{tpu_custom_call.1} parent=35 // pred_check
          %p213 = pneg %p84
        $region38: #{tpu_custom_call.1} parent=35 // pred_check_branch
          %215 = sbr.rel (%p213) target = $region40
        $region39: #{tpu_custom_call.1} parent=35 // pred_region
          %s216 = sand.u32 %s69, 1
          %s217 = scalar_lea.sflag [#allocation4], %s216
          %s218 = sand.u32 %s69, 1
          %s219 = smul.addr %s218, 2
          %s220 = scalar_lea.vmem [#allocation5], %s219
          %222 = dma.done %s217, 32
        $region40: #{tpu_custom_call.1} parent=35 // pred_fallthru
          _
      $region36: #{tpu_custom_call.1} parent=5 // pred_fallthru
        _
    $region6: #{tpu_custom_call.1} parent=1 // loop_footer
      %s17 = sadd.s32 1, %s13
    $region7: #{tpu_custom_call.1} parent=1 // loop_footer_branch
      %12 = sbr.rel target = $region3
    $region8: #{tpu_custom_call.1} parent=1 // loop_exit
      _
    %223 = vsyncpa [#allocation3], 1
    %s224 = scalar_lea.sflag [#allocation3], 1
    %225 = vsyncpa %s224, 1
    %226 = vsyncpa [#allocation4], 1
    %s227 = scalar_lea.sflag [#allocation4], 1
    %228 = vsyncpa %s227, 1

</llo_original>
